<compile_context>
chip_gen: v7x
topology: tpu7x:2x2x1
jax: 0.10.0
libtpu: 0.0.40
codegen_flags: <defaults>
</compile_context>

<pallas_src>
import functools

import jax
import jax.numpy as jnp
from jax.experimental import pallas as pl
from jax.experimental.pallas import tpu as pltpu

_MIB = 1024 * 1024


def layer_norm_kernel(x_ref, gamma_ref, beta_ref, o_ref, *, eps, inv_c):
    # x_ref block: (BB, C, TT).  The block ALWAYS spans the FULL channel dim,
    # so reducing over axis=1 yields the true per-(b, t) statistics; inv_c is
    # baked from the full channel count in the wrapper (do not tile C).
    x = x_ref[...].astype(jnp.float32)                      # (BB, C, TT)

    # Single streaming pass over channels (sublane reduction -> XLU):
    #   mean = S1/C,  var = S2/C - mean^2  (f32, clamp tiny negative values).
    s1 = jnp.sum(x, axis=1, keepdims=True)                  # (BB, 1, TT)
    s2 = jnp.sum(x * x, axis=1, keepdims=True)
    mean = s1 * inv_c
    var = jnp.maximum(s2 * inv_c - mean * mean, 0.0)
    inv_std = jax.lax.rsqrt(var + eps)                      # EUP

    g = gamma_ref[...].astype(jnp.float32)[None]            # (1, C, 1)
    b = beta_ref[...].astype(jnp.float32)[None]
    o_ref[...] = ((x - mean) * inv_std * g + b).astype(o_ref.dtype)


def _vmem_capacity_bytes():
    try:
        return int(pltpu.get_tpu_info().vmem_capacity_bytes)
    except Exception:
        return 64 * _MIB  # conservative default (v7x per-TensorCore VMEM)


def _pick_tiles(B, C, T):
    """Choose (BB batch tile, TT time tile, vmem_limit) from a VMEM budget."""
    vmem_cap = _vmem_capacity_bytes()
    # Per grid step: ~2x double-buffered in + 2x double-buffered out +
    # ~3 block-sized f32 temps  =>  ~7 block-equivalents at f32.
    FACTOR = 7
    step_budget = (vmem_cap * 2) // 5                       # ~40% of physical VMEM
    slab_budget = min(step_budget // FACTOR, 4 * _MIB)      # 1-4 MiB slab saturates HBM

    # Time tile: largest multiple of 128 lanes that fits the slab budget.
    tt = (slab_budget // (C * 4)) // 128 * 128
    if tt >= T or T < 128:
        tt = T                 # full time extent in one tile (legal for any T)
    tt = max(tt, min(T, 128))

    # Batch packing: if the whole time axis fits one tile (small C / short T),
    # pack several batch rows per step so each DMA moves more bytes.
    bb = 1
    if tt == T:
        bb = max(1, min(B, slab_budget // max(1, C * T * 4)))

    # v7x has 2 TensorCores: for problems with real work, make sure the
    # parallel grid exposes enough steps; otherwise keep the biggest tiles.
    def steps(bb_, tt_):
        return pl.cdiv(B, bb_) * pl.cdiv(T, tt_)

    if B * C * T * 4 > 16 * _MIB:
        while steps(bb, tt) < 8 and bb > 1:
            bb = max(1, bb // 2)
        while steps(bb, tt) < 8 and tt >= 1024 and tt % 256 == 0:
            tt //= 2

    step_bytes = FACTOR * bb * C * tt * 4
    vmem_limit = int(max(32 * _MIB, min((vmem_cap * 3) // 4, 2 * step_bytes)))
    return bb, tt, vmem_limit


def layer_norm_pallas(x, gamma, beta, eps=1e-4):
    """x: (B, C, *spatial) — normalization over dim 1, like the PyTorch module."""
    orig_shape = x.shape
    B, C = orig_shape[0], orig_shape[1]
    T = 1
    for d in orig_shape[2:]:
        T *= d
    if B == 0 or C == 0 or T == 0:
        return x
    x3 = x.reshape(B, C, T)

    bb, tt, vmem_limit = _pick_tiles(B, C, T)
    grid = (pl.cdiv(B, bb), pl.cdiv(T, tt))   # ragged tails are masked by Pallas

    gamma2 = gamma.reshape(C, 1)
    beta2 = beta.reshape(C, 1)

    kernel = functools.partial(layer_norm_kernel, eps=eps, inv_c=1.0 / C)

    out = pl.pallas_call(
        kernel,
        out_shape=jax.ShapeDtypeStruct((B, C, T), x.dtype),
        grid_spec=pltpu.PrefetchScalarGridSpec(
            num_scalar_prefetch=0,
            grid=grid,
            in_specs=[
                pl.BlockSpec((bb, C, tt), lambda b, t: (b, 0, t)),
                pl.BlockSpec((C, 1), lambda b, t: (0, 0)),
                pl.BlockSpec((C, 1), lambda b, t: (0, 0)),
            ],
            out_specs=pl.BlockSpec((bb, C, tt), lambda b, t: (b, 0, t)),
        ),
        compiler_params=pltpu.CompilerParams(
            dimension_semantics=("parallel", "parallel"),
            vmem_limit_bytes=vmem_limit),
    )(x3, gamma2, beta2)

    return out.reshape(orig_shape)


def layer_norm_reference(x, gamma, beta, eps=1e-4):
    """Pure-JAX reference mirroring the PyTorch module exactly."""
    mean = jnp.mean(x, axis=1, keepdims=True)
    var = jnp.mean((x - mean) ** 2, axis=1, keepdims=True)
    xn = (x - mean) * jax.lax.rsqrt(var + eps)
    shape = [1, -1] + [1] * (x.ndim - 2)
    return xn * gamma.reshape(shape) + beta.reshape(shape)


if __name__ == "__main__":
    eps = 1e-4
    key = jax.random.PRNGKey(0)
    kx, kg, kb, kx2 = jax.random.split(key, 4)

    # Small (batch, channels, time) shape consistent with GradTTS usage.
    B, C, T = 2, 4, 16
    x = jax.random.normal(kx, (B, C, T), dtype=jnp.float32)
    gamma = 1.0 + 0.1 * jax.random.normal(kg, (C,), dtype=jnp.float32)
    beta = 0.1 * jax.random.normal(kb, (C,), dtype=jnp.float32)

    out = jax.block_until_ready(layer_norm_pallas(x, gamma, beta, eps))
    ref = layer_norm_reference(x, gamma, beta, eps)
    assert out.shape == x.shape
    assert jnp.allclose(out, ref, atol=1e-5, rtol=1e-5), "mismatch vs reference (3D)"

    # Second shape: 4-D input with odd channel/spatial sizes to exercise the
    # reshape + batch-packing + full-extent-tile paths.
    B2, C2 = 3, 6
    x2 = jax.random.normal(kx2, (B2, C2, 5, 8), dtype=jnp.float32)
    gamma_b = 1.0 + 0.1 * jax.random.normal(kg, (C2,), dtype=jnp.float32)
    beta_b = 0.1 * jax.random.normal(kb, (C2,), dtype=jnp.float32)

    out2 = jax.block_until_ready(layer_norm_pallas(x2, gamma_b, beta_b, eps))
    ref2 = layer_norm_reference(x2, gamma_b, beta_b, eps)
    assert out2.shape == x2.shape
    assert jnp.allclose(out2, ref2, atol=1e-5, rtol=1e-5), "mismatch vs reference (4D)"

    print("KERNEL_OK")
</pallas_src>

<mosaic_0001>
module attributes {stable_mosaic.version = 11 : i64} {
  func.func @layer_norm_kernel(%arg0: i32, %arg1: i32, %arg2: memref<2x4x16xf32, #tpu.memory_space<vmem>>, %arg3: memref<4x1xf32, #tpu.memory_space<vmem>>, %arg4: memref<4x1xf32, #tpu.memory_space<vmem>>, %arg5: memref<2x4x16xf32, #tpu.memory_space<vmem>>) attributes {dimension_semantics = [#tpu.dimension_semantics<parallel>, #tpu.dimension_semantics<parallel>], iteration_bounds = array<i64: 1, 1>, scalar_prefetch = 0 : i64, scratch_operands = 0 : i64, tpu.core_type = #tpu.core_type<tc>, window_params = [{transform_indices = @transform_0, window_bounds = array<i64: 2, 4, 16>}, {pipeline_mode = #tpu.pipeline_mode<synchronous>, transform_indices = @transform_1, window_bounds = array<i64: 4, 1>}, {pipeline_mode = #tpu.pipeline_mode<synchronous>, transform_indices = @transform_2, window_bounds = array<i64: 4, 1>}, {transform_indices = @transform_3, window_bounds = array<i64: 2, 4, 16>}]} {
    %c0 = arith.constant 0 : index
    %c0_0 = arith.constant 0 : index
    %c0_1 = arith.constant 0 : index
    %0 = vector.load %arg2[%c0, %c0_0, %c0_1] : memref<2x4x16xf32, #tpu.memory_space<vmem>>, vector<2x4x16xf32>
    %cst = arith.constant dense<0.000000e+00> : vector<2x16xf32>
    %1 = vector.multi_reduction <add>, %0, %cst [1] : vector<2x4x16xf32> to vector<2x16xf32>
    %2 = vector.shape_cast %1 : vector<2x16xf32> to vector<2x1x16xf32>
    %3 = arith.mulf %0, %0 : vector<2x4x16xf32>
    %cst_2 = arith.constant dense<0.000000e+00> : vector<2x16xf32>
    %4 = vector.multi_reduction <add>, %3, %cst_2 [1] : vector<2x4x16xf32> to vector<2x16xf32>
    %5 = vector.shape_cast %4 : vector<2x16xf32> to vector<2x1x16xf32>
    %cst_3 = arith.constant 2.500000e-01 : f32
    %6 = vector.broadcast %cst_3 : f32 to vector<2x1x16xf32>
    %7 = arith.mulf %2, %6 : vector<2x1x16xf32>
    %cst_4 = arith.constant 2.500000e-01 : f32
    %8 = vector.broadcast %cst_4 : f32 to vector<2x1x16xf32>
    %9 = arith.mulf %5, %8 : vector<2x1x16xf32>
    %10 = arith.mulf %7, %7 : vector<2x1x16xf32>
    %11 = arith.subf %9, %10 : vector<2x1x16xf32>
    %cst_5 = arith.constant 0.000000e+00 : f32
    %12 = vector.broadcast %cst_5 : f32 to vector<2x1x16xf32>
    %13 = arith.maximumf %11, %12 : vector<2x1x16xf32>
    %cst_6 = arith.constant 9.99999974E-5 : f32
    %14 = vector.broadcast %cst_6 : f32 to vector<2x1x16xf32>
    %15 = arith.addf %13, %14 : vector<2x1x16xf32>
    %16 = math.rsqrt %15 : vector<2x1x16xf32>
    %c0_7 = arith.constant 0 : index
    %c0_8 = arith.constant 0 : index
    %17 = vector.load %arg3[%c0_7, %c0_8] : memref<4x1xf32, #tpu.memory_space<vmem>>, vector<4x1xf32>
    %18 = vector.shape_cast %17 : vector<4x1xf32> to vector<1x4x1xf32>
    %c0_9 = arith.constant 0 : index
    %c0_10 = arith.constant 0 : index
    %19 = vector.load %arg4[%c0_9, %c0_10] : memref<4x1xf32, #tpu.memory_space<vmem>>, vector<4x1xf32>
    %20 = vector.shape_cast %19 : vector<4x1xf32> to vector<1x4x1xf32>
    %21 = vector.broadcast %7 : vector<2x1x16xf32> to vector<2x4x16xf32>
    %22 = arith.subf %0, %21 : vector<2x4x16xf32>
    %23 = vector.broadcast %16 : vector<2x1x16xf32> to vector<2x4x16xf32>
    %24 = arith.mulf %22, %23 : vector<2x4x16xf32>
    %25 = vector.broadcast %18 : vector<1x4x1xf32> to vector<2x4x16xf32>
    %26 = arith.mulf %24, %25 : vector<2x4x16xf32>
    %27 = vector.broadcast %20 : vector<1x4x1xf32> to vector<2x4x16xf32>
    %28 = arith.addf %26, %27 : vector<2x4x16xf32>
    %c0_11 = arith.constant 0 : index
    %c0_12 = arith.constant 0 : index
    %c0_13 = arith.constant 0 : index
    %29 = vector.load %arg5[%c0_11, %c0_12, %c0_13] : memref<2x4x16xf32, #tpu.memory_space<vmem>>, vector<2x4x16xf32>
    tpu.vector_store %arg5[%c0_11, %c0_12, %c0_13], %28 {strides = array<i32>} : memref<2x4x16xf32, #tpu.memory_space<vmem>>, vector<2x4x16xf32>,
    return
  }
  func.func @transform_0(%arg0: i32, %arg1: i32) -> (i32, i32, i32) {
    %c0_i32 = arith.constant 0 : i32
    %c0_i32_0 = arith.constant 0 : i32
    return %arg0, %c0_i32, %arg1 : i32, i32, i32
  }
  func.func @transform_1(%arg0: i32, %arg1: i32) -> (i32, i32) {
    %c0_i32 = arith.constant 0 : i32
    %c0_i32_0 = arith.constant 0 : i32
    %c0_i32_1 = arith.constant 0 : i32
    return %c0_i32, %c0_i32_0 : i32, i32
  }
  func.func @transform_2(%arg0: i32, %arg1: i32) -> (i32, i32) {
    %c0_i32 = arith.constant 0 : i32
    %c0_i32_0 = arith.constant 0 : i32
    %c0_i32_1 = arith.constant 0 : i32
    return %c0_i32, %c0_i32_0 : i32, i32
  }
  func.func @transform_3(%arg0: i32, %arg1: i32) -> (i32, i32, i32) {
    %c0_i32 = arith.constant 0 : i32
    %c0_i32_0 = arith.constant 0 : i32
    return %arg0, %c0_i32, %arg1 : i32, i32, i32
  }
}

</mosaic_0001>

<llo_original>
// kernel: tpu_custom_call.1
$region0: #{tpu_custom_call.1}
  #allocation0 [shape = 'u32[]', space=smem, size = 0x4, offset = 0x4, fixed_abs, tag = 'smem constant byte address 0x4 - core index']
  #allocation1 [shape = 'u32[144,128]{1,0:T(1,128)}', space=vmem, size = 0x12000, scoped, tag = 'internal scratch']
  %s0 = inlined_call_operand.vmem [shape: f32[2,4,16], index: 0, kind: input, shape index: {}]
  %s1 = inlined_call_operand.vmem [shape: f32[4,1], index: 1, kind: input, shape index: {}]
  %s2 = inlined_call_operand.vmem [shape: f32[4,1], index: 2, kind: input, shape index: {}]
  %s3 = inlined_call_operand.hbm [shape: f32[2,4,16], index: 3, kind: output, shape index: {}]
  %s4 = sld [smem:[#allocation0]]
  $region22: #{tpu_custom_call.1} parent=0
    _
  %s6 = ssub.s32 1, %s4
  %s7 = scalar_select 0, %s6, %s4
  $region1: #{tpu_custom_call.1} parent=0
    #allocation2 [shape = 'u8[4096]{0}', space=vmem, size = 0x1000, scoped, tag = 'output window, operand 0, single buffered']
    #allocation3 [shape = 's32[1]{0}', space=sflag, size = 0x4, scoped, tag = 'scoped memory for tpu_custom_call.1']
    %8 = vsyncpa [#allocation3], 0
    // Predicated region
    $region2: #{tpu_custom_call.1} parent=1 // pred_check
      _
    $region3: #{tpu_custom_call.1} parent=1 // pred_check_branch
      %10 = sbr.rel (0) target = $region5
    $region4: #{tpu_custom_call.1} parent=1 // pred_region
      _
    $region5: #{tpu_custom_call.1} parent=1 // pred_fallthru
      _
    // Predicated region
    $region6: #{tpu_custom_call.1} parent=1 // pred_check
      _
    $region7: #{tpu_custom_call.1} parent=1 // pred_check_branch
      %12 = sbr.rel (0) target = $region9
    $region8: #{tpu_custom_call.1} parent=1 // pred_region
      _
    $region9: #{tpu_custom_call.1} parent=1 // pred_fallthru
      _
    // Predicated region
    $region10: #{tpu_custom_call.1} parent=1 // pred_check
      _
    $region11: #{tpu_custom_call.1} parent=1 // pred_check_branch
      %14 = sbr.rel (0) target = $region13
    $region12: #{tpu_custom_call.1} parent=1 // pred_region
      _
    $region13: #{tpu_custom_call.1} parent=1 // pred_fallthru
      _
    %v15 = vld [vmem:[%s0] sm:$0xf]
    %v16 = vld [vmem:[%s0 + $0x4] sm:$0xf]
    %vm17 = vcmask 125952
    %v18 = vsel %vm17, %v15, 0.0
    %v19 = vrot.slane %v18, 4
    %v20 = vadd.f32 %v18, %v19
    %v21 = vrot.slane %v20, 2
    %v22 = vadd.f32 %v20, %v21
    %v23 = vrot.slane %v22, 1
    %v24 = vadd.f32 %v22, %v23
    %v25 = vsel %vm17, %v16, 0.0
    %v26 = vrot.slane %v25, 4
    %v27 = vadd.f32 %v25, %v26
    %v28 = vrot.slane %v27, 2
    %v29 = vadd.f32 %v27, %v28
    %v30 = vrot.slane %v29, 1
    %v31 = vadd.f32 %v29, %v30
    %v32 = vmul.f32 %v15, %v15
    %v33 = vmul.f32 %v16, %v16
    %v34 = vsel %vm17, %v32, 0.0
    %v35 = vrot.slane %v34, 4
    %v36 = vadd.f32 %v34, %v35
    %v37 = vrot.slane %v36, 2
    %v38 = vadd.f32 %v36, %v37
    %v39 = vrot.slane %v38, 1
    %v40 = vadd.f32 %v38, %v39
    %v41 = vsel %vm17, %v33, 0.0
    %v42 = vrot.slane %v41, 4
    %v43 = vadd.f32 %v41, %v42
    %v44 = vrot.slane %v43, 2
    %v45 = vadd.f32 %v43, %v44
    %v46 = vrot.slane %v45, 1
    %v47 = vadd.f32 %v45, %v46
    %v48 = vmul.f32 %v24, 0.25
    %v49 = vmul.f32 %v31, 0.25
    %v50 = vmul.f32 %v40, 0.25
    %v51 = vmul.f32 %v47, 0.25
    %v52 = vmul.f32 %v48, %v48
    %v53 = vmul.f32 %v49, %v49
    %v54 = vsub.f32 %v50, %v52
    %v55 = vsub.f32 %v51, %v53
    %v56 = vmax.f32 %v54, 0.0
    %v57 = vmax.f32 %v55, 0.0
    %v58 = vadd.f32 %v56, 0.0001
    %v59 = vadd.f32 %v57, 0.0001
    %v60 = vrsqrt.pop %v58
    %v61 = vrsqrt.pop %v59
    %v62 = vld [vmem:[%s1] sm:$0xf]
    %v63 = vld [vmem:[%s2] sm:$0xf]
    %v64 = vsub.f32 %v15, %v48
    %v65 = vsub.f32 %v16, %v49
    %v66 = vmul.f32 %v64, %v60
    %v67 = vmul.f32 %v65, %v61
    %69 = vset.pattern.permute.xlu0 0
    %70 = vperm.xlu0 %69, %v62
    %v71 = vpop.permute.xlu0 %70
    %v73 = vmul.f32 %v66, %v71
    %v74 = vmul.f32 %v67, %v71
    %76 = vset.pattern.permute.xlu0 0
    %77 = vperm.xlu0 %76, %v63
    %v78 = vpop.permute.xlu0 %77
    %v80 = vadd.f32 %v73, %v78
    %v81 = vadd.f32 %v74, %v78
    %82 = vst.msk [vmem:[#allocation2] sm:$0xf] %vm17, %v80
    %83 = vst.msk [vmem:[#allocation2 + $0x4] sm:$0xf] %vm17, %v81
    // Predicated region
    $region14: #{tpu_custom_call.1} parent=1 // pred_check
      _
    $region15: #{tpu_custom_call.1} parent=1 // pred_check_branch
      %85 = sbr.rel (0) target = $region17
    $region16: #{tpu_custom_call.1} parent=1 // pred_region
      %s87 = ssub.s32 128, 128
      %88 = vsyncadd [#allocation3], %s87
      %s89 = sshll.u32 [#allocation2], 4
      %s90 = int_to_ptr.vmem [resolvable:$true] %s89
      %95 = dma.vmem_to_hbm [thread:$0]  %s90, 128, %s3, [#allocation3], 64, 64, 4
    $region17: #{tpu_custom_call.1} parent=1 // pred_fallthru
      _
    // Predicated region
    $region18: #{tpu_custom_call.1} parent=1 // pred_check
      _
    $region19: #{tpu_custom_call.1} parent=1 // pred_check_branch
      %97 = sbr.rel (0) target = $region21
    $region20: #{tpu_custom_call.1} parent=1 // pred_region
      %98 = dma.done [#allocation3], 128
    $region21: #{tpu_custom_call.1} parent=1 // pred_fallthru
      _
    %99 = vsyncpa [#allocation3], 1

</llo_original>
